<compile_context>
chip_gen: v7x
topology: tpu7x:2x2x1
jax: 0.10.0
libtpu: 0.0.40
codegen_flags: <defaults>
</compile_context>

<pallas_src>
import functools

import numpy as np
import jax
import jax.numpy as jnp
from jax.experimental import pallas as pl
from jax.experimental.pallas import tpu as pltpu

# softplus(-120) == 0.0 exactly in f32/bf16 (exp underflows to 0).  This sentinel
# bakes the frozen/padded weight slots into the dense raw matrix so no mask
# tensor is needed.  NOTE: relies on f32 evaluation of softplus (never f64).
_FROZEN_RAW = -120.0
# Keep the whole softplus'd weight VMEM-resident below this size.
_RESIDENT_W_BYTES = 12 * 1024 * 1024


def _round_up(x, m):
    return ((x + m - 1) // m) * m


def _vmem_limit_bytes():
    """Generation-gated VMEM budget: ~48 MiB on v7x (64 MiB/TC), ~96 MiB on v5e/v6e."""
    cap = 64 * 1024 * 1024
    try:
        cap = getattr(pltpu.get_tpu_info(), "vmem_capacity_bytes", cap)
    except Exception:
        pass
    if cap <= 64 * 1024 * 1024:
        return 48 * 1024 * 1024
    return 96 * 1024 * 1024


# ----------------------------------------------------------------------------
# Kernel 1: one fused elementwise pass  W_sp = softplus(W_raw)  (hoisted out of
# the matmul hot loop; runs once per forward over the weight).
# ----------------------------------------------------------------------------
def _softplus_weight_kernel(w_raw_ref, w_out_ref):
    # Numerically stable softplus; frozen/padded slots (-120) map to exactly 0,
    # which stays exactly 0 after the cast to the compute dtype.
    w_out_ref[...] = jnp.logaddexp(w_raw_ref[...], 0.0).astype(w_out_ref.dtype)


def softplus_weight_pallas(w_raw, out_dtype):
    """(K, N) f32 raw weight -> softplus(weight) in `out_dtype` (bf16/f32)."""
    K, N = w_raw.shape
    tr = K if (K % 8 != 0 or K <= 512) else 512      # full dim or (8,·)-aligned tile
    tc = min(N, 2048)                                # N is always a multiple of 128
    grid = (pl.cdiv(K, tr), pl.cdiv(N, tc))
    return pl.pallas_call(
        _softplus_weight_kernel,
        out_shape=jax.ShapeDtypeStruct((K, N), out_dtype),
        grid_spec=pltpu.PrefetchScalarGridSpec(
            num_scalar_prefetch=0,
            grid=grid,
            in_specs=[pl.BlockSpec((tr, tc), lambda i, j: (i, j))],
            out_specs=pl.BlockSpec((tr, tc), lambda i, j: (i, j)),
        ),
        compiler_params=pltpu.CompilerParams(
            dimension_semantics=("parallel", "parallel"),
            vmem_limit_bytes=_vmem_limit_bytes(),
        ),
    )(w_raw)


# ----------------------------------------------------------------------------
# Kernel 2a: resident-weight matmul.  Whole (K, N) weight + bias stay in VMEM
# (constant index_map); grid streams over batch only.  out = x @ W + b.
# ----------------------------------------------------------------------------
def _resident_matmul_kernel(x_ref, w_ref, b_ref, o_ref, *, compute_dtype):
    x = x_ref[...].astype(compute_dtype)              # cast in VMEM (cheap VPU op)
    acc = jnp.dot(x, w_ref[...], preferred_element_type=jnp.float32)
    o_ref[...] = (acc + b_ref[...]).astype(o_ref.dtype)


def matmul_resident_pallas(x, w, bias_row, *, compute_dtype, tm):
    B, K = x.shape
    K2, N = w.shape
    assert K == K2 and bias_row.shape == (1, N)
    grid = (pl.cdiv(B, tm),)                          # masked edge handling; no x padding
    kernel = functools.partial(_resident_matmul_kernel, compute_dtype=compute_dtype)
    return pl.pallas_call(
        kernel,
        out_shape=jax.ShapeDtypeStruct((B, N), jnp.float32),
        grid_spec=pltpu.PrefetchScalarGridSpec(
            num_scalar_prefetch=0,
            grid=grid,
            in_specs=[
                pl.BlockSpec((tm, K), lambda i: (i, 0)),    # x tile (streams over batch)
                pl.BlockSpec((K, N), lambda i: (0, 0)),     # full weight, VMEM-resident
                pl.BlockSpec((1, N), lambda i: (0, 0)),     # bias, VMEM-resident
            ],
            out_specs=pl.BlockSpec((tm, N), lambda i: (i, 0)),
        ),
        compiler_params=pltpu.CompilerParams(
            dimension_semantics=("parallel",),              # batch axis shards across TCs
            vmem_limit_bytes=_vmem_limit_bytes(),
        ),
    )(x, w, bias_row)


# ----------------------------------------------------------------------------
# Kernel 2b: tiled fallback for weights too large to keep resident.
# Enlarged tiles, f32 accumulator scratch, pl.when init/finalize.
# ----------------------------------------------------------------------------
def _tiled_matmul_kernel(x_ref, w_ref, b_ref, o_ref, acc_ref, *, compute_dtype):
    k = pl.program_id(2)

    @pl.when(k == 0)
    def _():
        acc_ref[...] = jnp.zeros_like(acc_ref)

    x = x_ref[...].astype(compute_dtype)
    acc_ref[...] += jnp.dot(x, w_ref[...], preferred_element_type=jnp.float32)

    @pl.when(k == pl.num_programs(2) - 1)
    def _():
        o_ref[...] = (acc_ref[...] + b_ref[...]).astype(o_ref.dtype)


def matmul_tiled_pallas(x, w, bias_row, *, compute_dtype, tm, tn, tk):
    B, K = x.shape
    K2, N = w.shape
    assert K == K2 and K % tk == 0 and N % tn == 0
    grid = (pl.cdiv(B, tm), N // tn, K // tk)             # reduction axis last
    kernel = functools.partial(_tiled_matmul_kernel, compute_dtype=compute_dtype)
    # NOTE: if profiling shows exposed DMA on the k-inner weight stream, add
    # pipeline_mode=pl.Buffered(3) to the x/weight BlockSpecs below.
    return pl.pallas_call(
        kernel,
        out_shape=jax.ShapeDtypeStruct((B, N), jnp.float32),
        grid_spec=pltpu.PrefetchScalarGridSpec(
            num_scalar_prefetch=0,
            grid=grid,
            in_specs=[
                pl.BlockSpec((tm, tk), lambda i, j, k: (i, k)),   # x tile
                pl.BlockSpec((tk, tn), lambda i, j, k: (k, j)),   # softplus'd weight tile
                pl.BlockSpec((1, tn), lambda i, j, k: (0, j)),    # bias tile
            ],
            out_specs=pl.BlockSpec((tm, tn), lambda i, j, k: (i, j)),
            scratch_shapes=[pltpu.VMEM((tm, tn), jnp.float32)],
        ),
        compiler_params=pltpu.CompilerParams(
            dimension_semantics=("parallel", "parallel", "arbitrary"),
            vmem_limit_bytes=_vmem_limit_bytes(),
        ),
    )(x, w, bias_row)


# ----------------------------------------------------------------------------
# Module setup glue (mirrors SoftplusLinear.__init__ in numpy)
# ----------------------------------------------------------------------------
def separate_weights(in_features, out_features, separate_inputs, separate_outputs):
    free_weights = np.full((out_features, in_features), False)
    input_indices = np.cumsum(separate_inputs) - separate_inputs
    output_indices = np.cumsum(separate_outputs) - separate_outputs
    for in_sz, out_sz, in_idx, out_idx in zip(separate_inputs, separate_outputs,
                                              input_indices, output_indices):
        free_weights[out_idx:out_idx + out_sz, in_idx:in_idx + in_sz] = True
    return free_weights


class SoftplusLinearJAX:
    def __init__(self, in_features, out_features, separate_inputs=None,
                 separate_outputs=None, zero_inputs=None, zero_outputs=None,
                 softplus=True, compute_dtype=jnp.bfloat16, key=None,
                 force_tiled=False):
        if zero_outputs is None:
            zero_outputs = np.zeros(out_features, dtype=np.int32)
        if zero_inputs is None:
            zero_inputs = np.zeros(in_features, dtype=np.int32)
        if separate_inputs is not None:
            assert int(np.sum(separate_inputs)) == in_features
            if separate_outputs is None:
                q, r = divmod(out_features, separate_inputs.shape[0])
                groups = [q + 1] * r + [q] * (separate_inputs.shape[0] - r)
                separate_outputs = np.array(groups)
            assert int(np.sum(separate_outputs)) == out_features
            free_weight = separate_weights(in_features, out_features,
                                           separate_inputs, separate_outputs)
        else:
            assert separate_outputs is None
            free_weight = np.full((out_features, in_features), True)
        free_weight[zero_outputs.astype(bool)] = False
        free_weight[:, zero_inputs.astype(bool)] = False

        self.in_features = in_features
        self.out_features = out_features
        self.softplus = softplus
        self.compute_dtype = compute_dtype
        self.force_tiled = force_tiled
        self.free_weight = free_weight                      # (Out, In) bool
        self.free_bias = (1 - zero_outputs).astype(bool)    # (Out,)   bool

        n_w = int(free_weight.sum())
        n_b = int(self.free_bias.sum())
        # reset_parameters() zeros these; small deterministic random values are
        # used instead so the kernel does non-trivial work.
        if key is None:
            key = jax.random.PRNGKey(0)
        kw, kb = jax.random.split(key)
        self.raw_weight_param = np.asarray(
            jax.random.normal(kw, (n_w,), dtype=jnp.float32)) * np.float32(0.1)
        self.bias_param = np.asarray(
            jax.random.normal(kb, (n_b,), dtype=jnp.float32)) * np.float32(0.1)

        self._build_device_params()

    # ------------------------------------------------------------------ plan
    def _plan(self):
        In, Out = self.in_features, self.out_features
        csize = jnp.dtype(self.compute_dtype).itemsize
        n128 = _round_up(Out, 128)                    # lane-dense output dim
        resident = (not self.force_tiled) and (In * n128 * csize <= _RESIDENT_W_BYTES)
        if resident:
            # Full-dim blocks: no padding of the contraction dim at all.
            return True, In, n128, None, None
        tk = 1024 if In >= 1024 else _round_up(In, 128)
        k_pad = _round_up(In, tk)
        tn = min(512, n128)
        n_pad = _round_up(Out, tn)
        return False, k_pad, n_pad, tn, tk

    # ------------------------------------------------------------------ cache
    def _build_device_params(self):
        """Static scatter of free params into dense, pre-transposed, padded
        matrices; cached on device once (not rebuilt / re-uploaded per call)."""
        In, Out = self.in_features, self.out_features
        resident, k_pad, n_pad, tn, tk = self._plan()
        fill = np.float32(_FROZEN_RAW) if self.softplus else np.float32(0.0)

        dense = np.full((Out, In), fill, np.float32)         # f32 only (sentinel trick)
        dense[self.free_weight] = self.raw_weight_param
        w_t = np.full((k_pad, n_pad), fill, np.float32)      # (In, Out) layout
        w_t[:In, :Out] = dense.T

        bias = np.zeros((Out,), np.float32)
        bias[self.free_bias] = self.bias_param
        bias_row = np.zeros((1, n_pad), np.float32)
        bias_row[0, :Out] = bias

        self._resident = resident
        self._k_pad, self._n_pad, self._tn, self._tk = k_pad, n_pad, tn, tk
        if self.softplus:
            # Cache raw weight; softplus runs as ONE Pallas pass per forward
            # (params are trainable in the original module).
            self._w_dev_raw = jnp.asarray(w_t)
            self._w_dev = None
        else:
            self._w_dev_raw = None
            self._w_dev = jnp.asarray(w_t, self.compute_dtype)
        self._bias_dev = jnp.asarray(bias_row)

    # --------------------------------------------------------------- forward
    def __call__(self, x):
        B, In = x.shape
        assert In == self.in_features
        Out = self.out_features

        # Hoisted softplus: one fused elementwise pass over W per forward.
        if self.softplus:
            w = softplus_weight_pallas(self._w_dev_raw, self.compute_dtype)
        else:
            w = self._w_dev

        x = jnp.asarray(x, jnp.float32)
        if self._k_pad > In:
            # Only pad activations when the contraction dim actually needs it
            # (never happens on the resident path).
            x = jnp.pad(x, ((0, 0), (0, self._k_pad - In)))

        # Batch tile: multiple of 8 (or the full dim), and >= 2 blocks whenever
        # the batch allows so both v7x TensorCores get a share.
        if B <= 16:
            tm = B
        else:
            tm = min(512, _round_up(pl.cdiv(B, 2), 8))

        if self._resident:
            out = matmul_resident_pallas(x, w, self._bias_dev,
                                         compute_dtype=self.compute_dtype, tm=tm)
        else:
            out = matmul_tiled_pallas(x, w, self._bias_dev,
                                      compute_dtype=self.compute_dtype,
                                      tm=tm, tn=self._tn, tk=self._tk)
        return out[:, :Out]

    # ------------------------------------------ pure-numpy (f64) reference
    def reference(self, x):
        Out, In = self.out_features, self.in_features
        w = np.zeros((Out, In), np.float64)
        rw = self.raw_weight_param.astype(np.float64)
        w[self.free_weight] = np.logaddexp(rw, 0.0) if self.softplus else rw
        b = np.zeros((Out,), np.float64)
        b[self.free_bias] = self.bias_param.astype(np.float64)
        return np.asarray(x, np.float64) @ w.T + b[None, :]


# ----------------------------------------------------------------------------
if __name__ == "__main__":
    key = jax.random.PRNGKey(0)
    k_x, k_x2, k_x3, k_params, k_params2 = jax.random.split(key, 5)

    # --- small IRT-like config: resident-weight path, bf16 MXU operands ------
    batch, in_features, out_features = 8, 32, 16
    x = jax.random.normal(k_x, (batch, in_features), dtype=jnp.float32)
    zero_inputs = np.zeros(in_features, dtype=np.int32); zero_inputs[0] = 1
    zero_outputs = np.zeros(out_features, dtype=np.int32); zero_outputs[-1] = 1

    layer_bf16 = SoftplusLinearJAX(in_features, out_features,
                                   zero_inputs=zero_inputs, zero_outputs=zero_outputs,
                                   softplus=True, compute_dtype=jnp.bfloat16,
                                   key=k_params)
    out = jax.block_until_ready(layer_bf16(x))
    np.testing.assert_allclose(np.asarray(out), layer_bf16.reference(np.asarray(x)),
                               rtol=3e-2, atol=3e-2)
    # zeroed output column must stay exactly zero even with bf16 operands
    assert np.all(np.asarray(out)[:, -1] == 0.0)

    # --- same layer, f32 compute, non-divisible batch (>=2 parallel blocks) --
    layer_f32 = SoftplusLinearJAX(in_features, out_features,
                                  zero_inputs=zero_inputs, zero_outputs=zero_outputs,
                                  softplus=True, compute_dtype=jnp.float32,
                                  key=k_params)
    x2 = jax.random.normal(k_x2, (300, in_features), dtype=jnp.float32)
    out2 = jax.block_until_ready(layer_f32(x2))
    np.testing.assert_allclose(np.asarray(out2), layer_f32.reference(np.asarray(x2)),
                               rtol=1e-4, atol=5e-4)

    # --- softplus=False path (plain masked linear), resident, f32 ------------
    layer_raw = SoftplusLinearJAX(in_features, out_features,
                                  zero_inputs=zero_inputs, zero_outputs=zero_outputs,
                                  softplus=False, compute_dtype=jnp.float32,
                                  key=k_params)
    out3 = jax.block_until_ready(layer_raw(x))
    np.testing.assert_allclose(np.asarray(out3), layer_raw.reference(np.asarray(x)),
                               rtol=1e-4, atol=5e-4)

    # --- grouped (separate_inputs) config on the tiled fallback path ---------
    b_t, in_t, out_t = 96, 256, 192
    sep_in = np.array([128, 128])
    x3 = jax.random.normal(k_x3, (b_t, in_t), dtype=jnp.float32)
    layer_tiled = SoftplusLinearJAX(in_t, out_t, separate_inputs=sep_in,
                                    softplus=True, compute_dtype=jnp.float32,
                                    key=k_params2, force_tiled=True)
    out4 = jax.block_until_ready(layer_tiled(x3))
    np.testing.assert_allclose(np.asarray(out4), layer_tiled.reference(np.asarray(x3)),
                               rtol=1e-4, atol=5e-4)

    print("KERNEL_OK")
</pallas_src>

<mosaic_0001>
module attributes {stable_mosaic.version = 11 : i64} {
  func.func @_softplus_weight_kernel(%arg0: i32, %arg1: i32, %arg2: memref<32x128xf32, #tpu.memory_space<vmem>>, %arg3: memref<32x128xbf16, #tpu.memory_space<vmem>>) attributes {dimension_semantics = [#tpu.dimension_semantics<parallel>, #tpu.dimension_semantics<parallel>], iteration_bounds = array<i64: 1, 1>, scalar_prefetch = 0 : i64, scratch_operands = 0 : i64, tpu.core_type = #tpu.core_type<tc>, window_params = [{transform_indices = @transform_0, window_bounds = array<i64: 32, 128>}, {transform_indices = @transform_1, window_bounds = array<i64: 32, 128>}]} {
    %c0 = arith.constant 0 : index
    %c0_0 = arith.constant 0 : index
    %0 = vector.load %arg2[%c0, %c0_0] : memref<32x128xf32, #tpu.memory_space<vmem>>, vector<32x128xf32>
    %cst = arith.constant 0.000000e+00 : f32
    %1 = vector.broadcast %cst : f32 to vector<32x128xf32>
    %2 = arith.maximumf %0, %1 : vector<32x128xf32>
    %3 = vector.broadcast %cst : f32 to vector<32x128xf32>
    %4 = arith.subf %0, %3 : vector<32x128xf32>
    %5 = arith.cmpf one, %4, %4 : vector<32x128xf32>
    %6 = vector.broadcast %cst : f32 to vector<32x128xf32>
    %7 = arith.addf %0, %6 : vector<32x128xf32>
    %8 = math.absf %4 : vector<32x128xf32>
    %cst_1 = arith.constant 0.000000e+00 : f32
    %9 = vector.broadcast %cst_1 : f32 to vector<32x128xf32>
    %10 = arith.subf %9, %8 : vector<32x128xf32>
    %11 = math.exp %10 : vector<32x128xf32>
    %12 = math.log1p %11 : vector<32x128xf32>
    %13 = arith.addf %2, %12 : vector<32x128xf32>
    %14 = arith.select %5, %7, %13 : vector<32x128xi1>, vector<32x128xf32>
    %15 = arith.truncf %14 : vector<32x128xf32> to vector<32x128xbf16>
    %c0_2 = arith.constant 0 : index
    %c0_3 = arith.constant 0 : index
    %16 = vector.load %arg3[%c0_2, %c0_3] : memref<32x128xbf16, #tpu.memory_space<vmem>>, vector<32x128xbf16>
    tpu.vector_store %arg3[%c0_2, %c0_3], %15 {strides = array<i32>} : memref<32x128xbf16, #tpu.memory_space<vmem>>, vector<32x128xbf16>,
    return
  }
  func.func @transform_0(%arg0: i32, %arg1: i32) -> (i32, i32) {
    %c0_i32 = arith.constant 0 : i32
    return %arg0, %arg1 : i32, i32
  }
  func.func @transform_1(%arg0: i32, %arg1: i32) -> (i32, i32) {
    %c0_i32 = arith.constant 0 : i32
    return %arg0, %arg1 : i32, i32
  }
}

</mosaic_0001>

<llo_original>
// kernel: tpu_custom_call.1
$region0: #{tpu_custom_call.1}
  #allocation0 [shape = 'u32[]', space=smem, size = 0x4, offset = 0x4, fixed_abs, tag = 'smem constant byte address 0x4 - core index']
  #allocation1 [shape = 'u32[144,128]{1,0:T(1,128)}', space=vmem, size = 0x12000, scoped, tag = 'internal scratch']
  %s0 = inlined_call_operand.hbm [shape: f32[32,128], index: 0, kind: input, shape index: {}]
  %s1 = inlined_call_operand.hbm [shape: bf16[32,128], index: 1, kind: output, shape index: {}]
  %s2 = sld [smem:[#allocation0]]
  $region18: #{tpu_custom_call.1} parent=0
    _
  %s4 = ssub.s32 1, %s2
  %s5 = scalar_select 0, %s4, %s2
  $region1: #{tpu_custom_call.1} parent=0
    #allocation2 [shape = 'u8[16384]{0}', space=vmem, size = 0x4000, scoped, tag = 'input window, operand 0, single buffered']
    #allocation3 [shape = 's32[1]{0}', space=sflag, size = 0x4, scoped, tag = 'scoped memory for tpu_custom_call.1']
    #allocation4 [shape = 's32[1]{0}', space=sflag, size = 0x4, scoped, tag = 'scoped memory for tpu_custom_call.1']
    #allocation5 [shape = 'u8[8192]{0}', space=vmem, size = 0x2000, scoped, tag = 'output window, operand 0, single buffered']
    %6 = vsyncpa [#allocation3], 0
    %7 = vsyncpa [#allocation4], 0
    // Predicated region
    $region2: #{tpu_custom_call.1} parent=1 // pred_check
      _
    $region3: #{tpu_custom_call.1} parent=1 // pred_check_branch
      %9 = sbr.rel (0) target = $region5
    $region4: #{tpu_custom_call.1} parent=1 // pred_region
      %s11 = ssub.s32 512, 512
      %12 = vsyncadd [#allocation3], %s11
      %s13 = sshll.u32 [#allocation2], 4
      %s14 = int_to_ptr.vmem [resolvable:$true] %s13
      %19 = dma.hbm_to_vmem [thread:$0]  %s0, 512, %s14, [#allocation3], 128, 128, 8
    $region5: #{tpu_custom_call.1} parent=1 // pred_fallthru
      _
    // Predicated region
    $region6: #{tpu_custom_call.1} parent=1 // pred_check
      _
    $region7: #{tpu_custom_call.1} parent=1 // pred_check_branch
      %21 = sbr.rel (0) target = $region9
    $region8: #{tpu_custom_call.1} parent=1 // pred_region
      %22 = dma.done [#allocation3], 512
    $region9: #{tpu_custom_call.1} parent=1 // pred_fallthru
      _
    %v23 = vld [vmem:[#allocation2] sm:$0xff]
    %v24 = vld [vmem:[#allocation2 + $0x8] sm:$0xff]
    %v25 = vld [vmem:[#allocation2 + $0x10] sm:$0xff]
    %v26 = vld [vmem:[#allocation2 + $0x18] sm:$0xff]
    %v27 = vmax.f32 %v23, 0.0
    %v28 = vmax.f32 %v24, 0.0
    %v29 = vmax.f32 %v25, 0.0
    %v30 = vmax.f32 %v26, 0.0
    %vm31 = vcmp.ne.f32.partialorder %v23, %v23
    %vm32 = vcmp.ne.f32.partialorder %v24, %v24
    %vm33 = vcmp.ne.f32.partialorder %v25, %v25
    %vm34 = vcmp.ne.f32.partialorder %v26, %v26
    %v35 = vadd.f32 %v23, 0.0
    %v36 = vadd.f32 %v24, 0.0
    %v37 = vadd.f32 %v25, 0.0
    %v38 = vadd.f32 %v26, 0.0
    %v39 = vand.u32 2147483647, %v23
    %v40 = vand.u32 2147483647, %v24
    %v41 = vand.u32 2147483647, %v25
    %v42 = vand.u32 2147483647, %v26
    %v43 = vsub.f32 0.0, %v39
    %v44 = vsub.f32 0.0, %v40
    %v45 = vsub.f32 0.0, %v41
    %v46 = vsub.f32 0.0, %v42
    %v47 = vmul.f32 %v43, 1.442695
    %v48 = vpow.pop %v47
    %v49 = vmul.f32 %v44, 1.442695
    %v50 = vpow.pop %v49
    %v51 = vmul.f32 %v45, 1.442695
    %v52 = vpow.pop %v51
    %v53 = vmul.f32 %v46, 1.442695
    %v54 = vpow.pop %v53
    %v55 = vadd.f32 %v48, 1.0
    %v56 = vlog2.pop %v55
    %v57 = vmul.f32 %v56, 0.6931472
    %v58 = vmul.f32 -0.5, %v48
    %v59 = vadd.f32 %v58, 1.0
    %v60 = vmul.f32 %v59, %v48
    %v61 = vand.u32 2147483647, %v48
    %vm62 = vcmp.lt.f32.partialorder %v61, 0.0004427343
    %v63 = vsel %vm62, %v60, %v57
    %v64 = vadd.f32 %v50, 1.0
    %v65 = vlog2.pop %v64
    %v66 = vmul.f32 %v65, 0.6931472
    %v67 = vmul.f32 -0.5, %v50
    %v68 = vadd.f32 %v67, 1.0
    %v69 = vmul.f32 %v68, %v50
    %v70 = vand.u32 2147483647, %v50
    %vm71 = vcmp.lt.f32.partialorder %v70, 0.0004427343
    %v72 = vsel %vm71, %v69, %v66
    %v73 = vadd.f32 %v52, 1.0
    %v74 = vlog2.pop %v73
    %v75 = vmul.f32 %v74, 0.6931472
    %v76 = vmul.f32 -0.5, %v52
    %v77 = vadd.f32 %v76, 1.0
    %v78 = vmul.f32 %v77, %v52
    %v79 = vand.u32 2147483647, %v52
    %vm80 = vcmp.lt.f32.partialorder %v79, 0.0004427343
    %v81 = vsel %vm80, %v78, %v75
    %v82 = vadd.f32 %v54, 1.0
    %v83 = vlog2.pop %v82
    %v84 = vmul.f32 %v83, 0.6931472
    %v85 = vmul.f32 -0.5, %v54
    %v86 = vadd.f32 %v85, 1.0
    %v87 = vmul.f32 %v86, %v54
    %v88 = vand.u32 2147483647, %v54
    %vm89 = vcmp.lt.f32.partialorder %v88, 0.0004427343
    %v90 = vsel %vm89, %v87, %v84
    %v91 = vadd.f32 %v27, %v63
    %v92 = vadd.f32 %v28, %v72
    %v93 = vadd.f32 %v29, %v81
    %v94 = vadd.f32 %v30, %v90
    %v95 = vsel %vm31, %v35, %v91
    %v96 = vsel %vm32, %v36, %v92
    %v97 = vsel %vm33, %v37, %v93
    %v98 = vsel %vm34, %v38, %v94
    %v99 = vpack.c.bf16 %v96, %v95
    %v100 = vpack.c.bf16 %v98, %v97
    %v103 = vunpack.c.l.b16 %v99
    %v104 = vunpack.c.h.b16 %v99
    %v105 = vunpack.c.l.b16 %v100
    %v106 = vunpack.c.h.b16 %v100
    %v107 = vpack.c.b16 %v103, %v103
    %v108 = vpack.c.b16 %v104, %v104
    %v109 = vpack.c.b16 %v105, %v105
    %v110 = vpack.c.b16 %v106, %v106
    %115 = vst [vmem:[#allocation5] sm:$0xf] %v107
    %116 = vst [vmem:[#allocation5 + $0x4] sm:$0xf] %v108
    %117 = vst [vmem:[#allocation5 + $0x8] sm:$0xf] %v109
    %118 = vst [vmem:[#allocation5 + $0xc] sm:$0xf] %v110
    // Predicated region
    $region10: #{tpu_custom_call.1} parent=1 // pred_check
      _
    $region11: #{tpu_custom_call.1} parent=1 // pred_check_branch
      %120 = sbr.rel (0) target = $region13
    $region12: #{tpu_custom_call.1} parent=1 // pred_region
      %s122 = ssub.s32 256, 256
      %123 = vsyncadd [#allocation4], %s122
      %s124 = sshll.u32 [#allocation5], 4
      %s125 = int_to_ptr.vmem [resolvable:$true] %s124
      %130 = dma.vmem_to_hbm [thread:$0]  %s125, 256, %s1, [#allocation4], 64, 64, 4
    $region13: #{tpu_custom_call.1} parent=1 // pred_fallthru
      _
    // Predicated region
    $region14: #{tpu_custom_call.1} parent=1 // pred_check
      _
    $region15: #{tpu_custom_call.1} parent=1 // pred_check_branch
      %132 = sbr.rel (0) target = $region17
    $region16: #{tpu_custom_call.1} parent=1 // pred_region
      %133 = dma.done [#allocation4], 256
    $region17: #{tpu_custom_call.1} parent=1 // pred_fallthru
      _
    %134 = vsyncpa [#allocation3], 1
    %135 = vsyncpa [#allocation4], 1

</llo_original>
